<compile_context>
chip_gen: v6e
topology: v6e:2x2x1
jax: 0.10.0
libtpu: 0.0.40
codegen_flags: <defaults>
</compile_context>

<pallas_src>
import jax
import jax.numpy as jnp
from jax.experimental import pallas as pl
from jax.experimental.pallas import tpu as pltpu

STATE_DIM = 55
ACTION_DIM = 21
IN_DIM = STATE_DIM + ACTION_DIM          # 76
HIDDEN_DIM = 128
NUM_HEADS = 4
HEAD_DIM = HIDDEN_DIM // NUM_HEADS       # 32
ATTN_LAYERS = 2
IN_PAD = 128                             # input features (+ ones column) padded to 128 lanes
OUT_PAD = 128                            # output features padded to 128 lanes (lane-dense vst)
MAX_TB = 1024                            # batch tile upper bound


def predictor_kernel(x_ref, w1_ref, wf_ref, bf_ref, o_ref):
    # fc1 (+ folded bias via ones column) + ReLU; f32 MXU accumulation.
    h = jnp.dot(x_ref[...], w1_ref[...], preferred_element_type=jnp.float32)
    h = jnp.maximum(h, 0.0)
    # folded (attention x ATTN_LAYERS + fc2) affine map, lane-dense 128-wide output.
    o_ref[...] = (jnp.dot(h.astype(wf_ref.dtype), wf_ref[...],
                          preferred_element_type=jnp.float32)
                  + bf_ref[...]).astype(o_ref.dtype)


def init_params(key):
    """Deterministic synthetic parameters matching the torch module's shapes
    (already transposed to (in, out) layout for x @ W)."""
    ks = jax.random.split(key, 8)
    scale = 0.05
    w_fc1 = scale * jax.random.normal(ks[0], (HIDDEN_DIM, IN_DIM), jnp.float32)
    b_fc1 = scale * jax.random.normal(ks[1], (HIDDEN_DIM,), jnp.float32)
    in_proj_w = scale * jax.random.normal(ks[2], (3 * HIDDEN_DIM, HIDDEN_DIM), jnp.float32)
    in_proj_b = scale * jax.random.normal(ks[3], (3 * HIDDEN_DIM,), jnp.float32)
    w_out = scale * jax.random.normal(ks[4], (HIDDEN_DIM, HIDDEN_DIM), jnp.float32)
    b_out = scale * jax.random.normal(ks[5], (HIDDEN_DIM,), jnp.float32)
    w_fc2 = scale * jax.random.normal(ks[6], (STATE_DIM, HIDDEN_DIM), jnp.float32)
    b_fc2 = scale * jax.random.normal(ks[7], (STATE_DIM,), jnp.float32)

    return dict(
        w1=w_fc1.T, b1=b_fc1.reshape(1, -1),
        wq=in_proj_w[0 * HIDDEN_DIM:1 * HIDDEN_DIM].T,
        wk=in_proj_w[1 * HIDDEN_DIM:2 * HIDDEN_DIM].T,
        wv=in_proj_w[2 * HIDDEN_DIM:3 * HIDDEN_DIM].T,
        bq=in_proj_b[0 * HIDDEN_DIM:1 * HIDDEN_DIM].reshape(1, -1),
        bk=in_proj_b[1 * HIDDEN_DIM:2 * HIDDEN_DIM].reshape(1, -1),
        bv=in_proj_b[2 * HIDDEN_DIM:3 * HIDDEN_DIM].reshape(1, -1),
        wo=w_out.T, bo=b_out.reshape(1, -1),
        w2=w_fc2.T, b2=b_fc2.reshape(1, -1),
    )


def fold_params(p, compute_dtype=jnp.bfloat16):
    """One-time precompute: fold the (seq_len==1) attention stack and fc2 into a
    single affine map, fold b_fc1 into W1 (ones-column trick) and pad feature
    dims to 128 lanes. Call once at init; the results are plain arrays."""
    f32 = jnp.float32
    # One attention layer with a single token: attn weights == 1.0, so
    #   h -> (h @ Wv + bv) @ Wo + bo  ==  h @ A + c
    A = p["wv"].astype(f32) @ p["wo"].astype(f32)                        # (H, H)
    c = p["bv"].astype(f32) @ p["wo"].astype(f32) + p["bo"].astype(f32)  # (1, H)
    # ATTN_LAYERS applications of the SAME module (shared weights), then fc2.
    Wacc = jnp.eye(HIDDEN_DIM, dtype=f32)
    bacc = jnp.zeros((1, HIDDEN_DIM), f32)
    for _ in range(ATTN_LAYERS):
        Wacc = Wacc @ A
        bacc = bacc @ A + c
    Wf = Wacc @ p["w2"].astype(f32)                                      # (H, STATE_DIM)
    bf = bacc @ p["w2"].astype(f32) + p["b2"].astype(f32)                # (1, STATE_DIM)

    # Pad W1 rows 76 -> 128; row 76 carries b_fc1 (multiplied by the ones column of x).
    w1p = jnp.zeros((IN_PAD, HIDDEN_DIM), f32)
    w1p = w1p.at[:IN_DIM, :].set(p["w1"].astype(f32))
    w1p = w1p.at[IN_DIM, :].set(p["b1"][0].astype(f32))
    # Pad folded output map 55 -> 128 lanes.
    wfp = jnp.zeros((HIDDEN_DIM, OUT_PAD), f32).at[:, :STATE_DIM].set(Wf)
    bfp = jnp.zeros((1, OUT_PAD), f32).at[:, :STATE_DIM].set(bf)

    return dict(
        w1=w1p.astype(compute_dtype),
        wf=wfp.astype(compute_dtype),
        bf=bfp,                          # final bias stays f32 (added post f32-accum)
    )


def _tile(B):
    """Batch tile: big for bandwidth, >=2 grid steps for B>64 (v7x megacore),
    and chosen to bound batch-padding waste."""
    if B <= 64:
        tb = max(8, pl.cdiv(B, 8) * 8)
    else:
        tb = min(MAX_TB, pl.cdiv(pl.cdiv(B, 2), 8) * 8)
    B_pad = pl.cdiv(B, tb) * tb
    return tb, B_pad


@jax.jit
def predict(x, w1, wf, bf):
    """x: (B, 76) f32. w1/wf/bf: folded params from fold_params(). Returns (B, 55) f32."""
    compute_dtype = w1.dtype
    B = x.shape[0]
    tb, B_pad = _tile(B)

    # Pad/cast fused under this jit: lane-dense (B_pad, 128) slab, ones column at 76.
    xp = jnp.zeros((B_pad, IN_PAD), compute_dtype)
    xp = xp.at[:B, :IN_DIM].set(x.astype(compute_dtype))
    xp = xp.at[:B, IN_DIM].set(1.0)

    weights = [w1, wf, bf]
    full = lambda arr: pl.BlockSpec(arr.shape, lambda i, nd=arr.ndim: (0,) * nd)

    out = pl.pallas_call(
        predictor_kernel,
        out_shape=jax.ShapeDtypeStruct((B_pad, OUT_PAD), compute_dtype),
        grid_spec=pltpu.PrefetchScalarGridSpec(
            num_scalar_prefetch=0,
            grid=(B_pad // tb,),
            in_specs=[pl.BlockSpec((tb, IN_PAD), lambda i: (i, 0))]
                     + [full(w) for w in weights],
            out_specs=pl.BlockSpec((tb, OUT_PAD), lambda i: (i, 0)),
        ),
        compiler_params=pltpu.CompilerParams(
            dimension_semantics=("parallel",),
            vmem_limit_bytes=32 * 1024 * 1024,
        ),
    )(xp, *weights)

    # Slice + upcast fused under the same jit (no separate slice pass).
    return out[:B, :STATE_DIM].astype(jnp.float32)


def reference(x, p):
    """Pure-JAX replica of the PyTorch forward (return_attn=False), unfolded."""
    h = jax.nn.relu(x @ p["w1"] + p["b1"])
    B = h.shape[0]
    for _ in range(ATTN_LAYERS):
        q = (h @ p["wq"] + p["bq"]).reshape(B, NUM_HEADS, HEAD_DIM)
        k = (h @ p["wk"] + p["bk"]).reshape(B, NUM_HEADS, HEAD_DIM)
        v = (h @ p["wv"] + p["bv"]).reshape(B, NUM_HEADS, HEAD_DIM)
        s = jnp.einsum("bhd,bhd->bh", q, k) / jnp.sqrt(jnp.float32(HEAD_DIM))
        w = jax.nn.softmax(s[..., None], axis=-1)[..., 0]     # seq_len==1 -> all ones
        attn = (w[..., None] * v).reshape(B, HIDDEN_DIM)
        h = attn @ p["wo"] + p["bo"]
    return h @ p["w2"] + p["b2"]


if __name__ == "__main__":
    key = jax.random.PRNGKey(0)
    kx, kp = jax.random.split(key)
    params = init_params(kp)

    fp_bf16 = fold_params(params, jnp.bfloat16)   # default fast path
    fp_f32 = fold_params(params, jnp.float32)     # exact-tolerance validation path

    for B in (8, 96):   # 96 > 64 exercises the multi-step (megacore-friendly) grid
        x = jax.random.normal(jax.random.fold_in(kx, B), (B, IN_DIM), jnp.float32)
        ref = reference(x, params)

        out_bf16 = predict(x, fp_bf16["w1"], fp_bf16["wf"], fp_bf16["bf"])
        jax.block_until_ready(out_bf16)
        assert out_bf16.shape == (B, STATE_DIM), out_bf16.shape
        err_bf16 = float(jnp.max(jnp.abs(out_bf16 - ref)))
        assert jnp.allclose(out_bf16, ref, atol=2e-2, rtol=2e-2), err_bf16

        out_f32 = predict(x, fp_f32["w1"], fp_f32["wf"], fp_f32["bf"])
        jax.block_until_ready(out_f32)
        err_f32 = float(jnp.max(jnp.abs(out_f32 - ref)))
        assert jnp.allclose(out_f32, ref, atol=1e-4, rtol=1e-4), err_f32

    print("KERNEL_OK")
</pallas_src>

<mosaic_0001>
module attributes {stable_mosaic.version = 11 : i64} {
  func.func @predictor_kernel(%arg0: i32, %arg1: memref<8x128xbf16, #tpu.memory_space<vmem>>, %arg2: memref<128x128xbf16, #tpu.memory_space<vmem>>, %arg3: memref<128x128xbf16, #tpu.memory_space<vmem>>, %arg4: memref<1x128xf32, #tpu.memory_space<vmem>>, %arg5: memref<8x128xbf16, #tpu.memory_space<vmem>>) attributes {dimension_semantics = [#tpu.dimension_semantics<parallel>], iteration_bounds = array<i64: 1>, scalar_prefetch = 0 : i64, scratch_operands = 0 : i64, tpu.core_type = #tpu.core_type<tc>, window_params = [{transform_indices = @transform_0, window_bounds = array<i64: 8, 128>}, {pipeline_mode = #tpu.pipeline_mode<synchronous>, transform_indices = @transform_1, window_bounds = array<i64: 128, 128>}, {pipeline_mode = #tpu.pipeline_mode<synchronous>, transform_indices = @transform_2, window_bounds = array<i64: 128, 128>}, {pipeline_mode = #tpu.pipeline_mode<synchronous>, transform_indices = @transform_3, window_bounds = array<i64: 1, 128>}, {transform_indices = @transform_4, window_bounds = array<i64: 8, 128>}]} {
    %c0 = arith.constant 0 : index
    %c0_0 = arith.constant 0 : index
    %0 = vector.load %arg1[%c0, %c0_0] : memref<8x128xbf16, #tpu.memory_space<vmem>>, vector<8x128xbf16>
    %c0_1 = arith.constant 0 : index
    %c0_2 = arith.constant 0 : index
    %1 = vector.load %arg2[%c0_1, %c0_2] : memref<128x128xbf16, #tpu.memory_space<vmem>>, vector<128x128xbf16>
    %cst = arith.constant dense<0.000000e+00> : vector<8x128xf32>
    %2 = tpu.matmul %0, %1, %cst {dimension_numbers = #tpu.dot_dimension_numbers<[1], [0], [0], [1], [0, 0, 1, 1], [], []>} : vector<8x128xbf16>, vector<128x128xbf16>, vector<8x128xf32> -> vector<8x128xf32>
    %cst_3 = arith.constant 0.000000e+00 : f32
    %3 = vector.broadcast %cst_3 : f32 to vector<8x128xf32>
    %4 = arith.maximumf %2, %3 : vector<8x128xf32>
    %5 = arith.truncf %4 : vector<8x128xf32> to vector<8x128xbf16>
    %c0_4 = arith.constant 0 : index
    %c0_5 = arith.constant 0 : index
    %6 = vector.load %arg3[%c0_4, %c0_5] : memref<128x128xbf16, #tpu.memory_space<vmem>>, vector<128x128xbf16>
    %cst_6 = arith.constant dense<0.000000e+00> : vector<8x128xf32>
    %7 = tpu.matmul %5, %6, %cst_6 {dimension_numbers = #tpu.dot_dimension_numbers<[1], [0], [0], [1], [0, 0, 1, 1], [], []>} : vector<8x128xbf16>, vector<128x128xbf16>, vector<8x128xf32> -> vector<8x128xf32>
    %c0_7 = arith.constant 0 : index
    %c0_8 = arith.constant 0 : index
    %8 = vector.load %arg4[%c0_7, %c0_8] : memref<1x128xf32, #tpu.memory_space<vmem>>, vector<1x128xf32>
    %9 = vector.broadcast %8 : vector<1x128xf32> to vector<8x128xf32>
    %10 = arith.addf %7, %9 : vector<8x128xf32>
    %11 = arith.truncf %10 : vector<8x128xf32> to vector<8x128xbf16>
    %c0_9 = arith.constant 0 : index
    %c0_10 = arith.constant 0 : index
    %12 = vector.load %arg5[%c0_9, %c0_10] : memref<8x128xbf16, #tpu.memory_space<vmem>>, vector<8x128xbf16>
    tpu.vector_store %arg5[%c0_9, %c0_10], %11 {strides = array<i32>} : memref<8x128xbf16, #tpu.memory_space<vmem>>, vector<8x128xbf16>,
    return
  }
  func.func @transform_0(%arg0: i32) -> (i32, i32) {
    %c0_i32 = arith.constant 0 : i32
    %c0_i32_0 = arith.constant 0 : i32
    return %arg0, %c0_i32 : i32, i32
  }
  func.func @transform_1(%arg0: i32) -> (i32, i32) {
    %c0_i32 = arith.constant 0 : i32
    %c0_i32_0 = arith.constant 0 : i32
    %c0_i32_1 = arith.constant 0 : i32
    return %c0_i32, %c0_i32_0 : i32, i32
  }
  func.func @transform_2(%arg0: i32) -> (i32, i32) {
    %c0_i32 = arith.constant 0 : i32
    %c0_i32_0 = arith.constant 0 : i32
    %c0_i32_1 = arith.constant 0 : i32
    return %c0_i32, %c0_i32_0 : i32, i32
  }
  func.func @transform_3(%arg0: i32) -> (i32, i32) {
    %c0_i32 = arith.constant 0 : i32
    %c0_i32_0 = arith.constant 0 : i32
    %c0_i32_1 = arith.constant 0 : i32
    return %c0_i32, %c0_i32_0 : i32, i32
  }
  func.func @transform_4(%arg0: i32) -> (i32, i32) {
    %c0_i32 = arith.constant 0 : i32
    %c0_i32_0 = arith.constant 0 : i32
    return %arg0, %c0_i32 : i32, i32
  }
}

</mosaic_0001>

<llo_original>
// kernel: predict.1
$region0: #{predict.1}
  #allocation0 [shape = 'u32[]', space=smem, size = 0x4, offset = 0x4, fixed_abs, tag = 'smem constant byte address 0x4 - core index']
  #allocation1 [shape = 'u32[144,128]{1,0:T(1,128)}', space=vmem, size = 0x12000, scoped, tag = 'internal scratch']
  %s0 = inlined_call_operand.vmem [shape: bf16[8,128], index: 0, kind: input, shape index: {}]
  %s1 = inlined_call_operand.hbm [shape: bf16[128,128], index: 1, kind: input, shape index: {}]
  %s2 = inlined_call_operand.hbm [shape: bf16[128,128], index: 2, kind: input, shape index: {}]
  %s3 = inlined_call_operand.vmem [shape: f32[1,128], index: 3, kind: input, shape index: {}]
  %s4 = inlined_call_operand.vmem [shape: bf16[8,128], index: 4, kind: output, shape index: {}]
  %s5 = sld [smem:[#allocation0]]
  $region34: #{predict.1} parent=0
    _
  %s7 = ssub.s32 1, %s5
  %s8 = scalar_select 0, %s7, %s5
  $region1: #{predict.1} parent=0
    #allocation2 [shape = 'u8[32768]{0}', space=vmem, size = 0x8000, scoped, tag = 'input window, operand 1, single buffered']
    #allocation3 [shape = 's32[1]{0}', space=sflag, size = 0x4, scoped, tag = 'scoped memory for predict.1']
    #allocation4 [shape = 'u8[32768]{0}', space=vmem, size = 0x8000, scoped, tag = 'input window, operand 2, single buffered']
    #allocation5 [shape = 's32[1]{0}', space=sflag, size = 0x4, scoped, tag = 'scoped memory for predict.1']
    %9 = vsyncpa [#allocation3], 0
    %10 = vsyncpa [#allocation5], 0
    // Predicated region
    $region2: #{predict.1} parent=1 // pred_check
      _
    $region3: #{predict.1} parent=1 // pred_check_branch
      %12 = sbr.rel (0) target = $region5
    $region4: #{predict.1} parent=1 // pred_region
      _
    $region5: #{predict.1} parent=1 // pred_fallthru
      _
    // Predicated region
    $region6: #{predict.1} parent=1 // pred_check
      _
    $region7: #{predict.1} parent=1 // pred_check_branch
      %14 = sbr.rel (0) target = $region9
    $region8: #{predict.1} parent=1 // pred_region
      %s16 = ssub.s32 1024, 1024
      %17 = vsyncadd [#allocation3], %s16
      %s18 = sshll.u32 [#allocation2], 4
      %s19 = int_to_ptr.vmem [resolvable:$true] %s18
      %24 = dma.hbm_to_vmem [thread:$0]  %s1, 1024, %s19, [#allocation3], 64, 64, 4
    $region9: #{predict.1} parent=1 // pred_fallthru
      _
    // Predicated region
    $region10: #{predict.1} parent=1 // pred_check
      _
    $region11: #{predict.1} parent=1 // pred_check_branch
      %26 = sbr.rel (0) target = $region13
    $region12: #{predict.1} parent=1 // pred_region
      %s28 = ssub.s32 1024, 1024
      %29 = vsyncadd [#allocation5], %s28
      %s30 = sshll.u32 [#allocation4], 4
      %s31 = int_to_ptr.vmem [resolvable:$true] %s30
      %36 = dma.hbm_to_vmem [thread:$0]  %s2, 1024, %s31, [#allocation5], 64, 64, 4
    $region13: #{predict.1} parent=1 // pred_fallthru
      _
    // Predicated region
    $region14: #{predict.1} parent=1 // pred_check
      _
    $region15: #{predict.1} parent=1 // pred_check_branch
      %38 = sbr.rel (0) target = $region17
    $region16: #{predict.1} parent=1 // pred_region
      _
    $region17: #{predict.1} parent=1 // pred_fallthru
      _
    // Predicated region
    $region18: #{predict.1} parent=1 // pred_check
      _
    $region19: #{predict.1} parent=1 // pred_check_branch
      %40 = sbr.rel (0) target = $region21
    $region20: #{predict.1} parent=1 // pred_region
      %41 = dma.done [#allocation3], 1024
    $region21: #{predict.1} parent=1 // pred_fallthru
      _
    // Predicated region
    $region22: #{predict.1} parent=1 // pred_check
      _
    $region23: #{predict.1} parent=1 // pred_check_branch
      %43 = sbr.rel (0) target = $region25
    $region24: #{predict.1} parent=1 // pred_region
      %44 = dma.done [#allocation5], 1024
    $region25: #{predict.1} parent=1 // pred_fallthru
      _
    %v46 = vld [vmem:[%s0] sm:$0xf]
    %v47 = vld [vmem:[#allocation2] sm:$0xf]
    %v48 = vld [vmem:[#allocation2 + $0x4] sm:$0xf]
    %v49 = vld [vmem:[#allocation2 + $0x8] sm:$0xf]
    %v50 = vld [vmem:[#allocation2 + $0xc] sm:$0xf]
    %v51 = vld [vmem:[#allocation2 + $0x10] sm:$0xf]
    %v52 = vld [vmem:[#allocation2 + $0x14] sm:$0xf]
    %v53 = vld [vmem:[#allocation2 + $0x18] sm:$0xf]
    %v54 = vld [vmem:[#allocation2 + $0x1c] sm:$0xf]
    %v55 = vld [vmem:[#allocation2 + $0x20] sm:$0xf]
    %v56 = vld [vmem:[#allocation2 + $0x24] sm:$0xf]
    %v57 = vld [vmem:[#allocation2 + $0x28] sm:$0xf]
    %v58 = vld [vmem:[#allocation2 + $0x2c] sm:$0xf]
    %v59 = vld [vmem:[#allocation2 + $0x30] sm:$0xf]
    %v60 = vld [vmem:[#allocation2 + $0x34] sm:$0xf]
    %v61 = vld [vmem:[#allocation2 + $0x38] sm:$0xf]
    %v62 = vld [vmem:[#allocation2 + $0x3c] sm:$0xf]
    %v79 = vunpack.c.l.b16 %v47
    %v80 = vunpack.c.l.b16 %v48
    %v81 = vunpack.c.l.b16 %v49
    %v82 = vunpack.c.l.b16 %v50
    %v83 = vunpack.c.l.b16 %v51
    %v84 = vunpack.c.l.b16 %v52
    %v85 = vunpack.c.l.b16 %v53
    %v86 = vunpack.c.l.b16 %v54
    %v87 = vunpack.c.l.b16 %v55
    %v88 = vunpack.c.l.b16 %v56
    %v89 = vunpack.c.l.b16 %v57
    %v90 = vunpack.c.l.b16 %v58
    %v91 = vunpack.c.l.b16 %v59
    %v92 = vunpack.c.l.b16 %v60
    %v93 = vunpack.c.l.b16 %v61
    %v94 = vunpack.c.l.b16 %v62
    %v95 = vpack.c.b16 %v80, %v79
    %v96 = vpack.c.b16 %v82, %v81
    %v97 = vpack.c.b16 %v84, %v83
    %v98 = vpack.c.b16 %v86, %v85
    %v99 = vpack.c.b16 %v88, %v87
    %v100 = vpack.c.b16 %v90, %v89
    %v101 = vpack.c.b16 %v92, %v91
    %v102 = vpack.c.b16 %v94, %v93
    %111 = vmatprep.subr.bf16.mxu0 0
    %112 = vmatpush1.bf16.msra.mxu0 %v102
    %113 = vmatprep.subr.bf16.mxu0 0
    %114 = vmatpush1.bf16.msra.mxu0 %v101
    %115 = vmatprep.subr.bf16.mxu0 0
    %116 = vmatpush1.bf16.msra.mxu0 %v100
    %117 = vmatprep.subr.bf16.mxu0 0
    %118 = vmatpush1.bf16.msra.mxu0 %v99
    %119 = vmatprep.subr.bf16.mxu0 0
    %120 = vmatpush1.bf16.msra.mxu0 %v98
    %121 = vmatprep.subr.bf16.mxu0 0
    %122 = vmatpush1.bf16.msra.mxu0 %v97
    %123 = vmatprep.subr.bf16.mxu0 0
    %124 = vmatpush1.bf16.msra.mxu0 %v96
    %125 = vmatprep.subr.bf16.mxu0 0
    %126 = vmatpush1.bf16.msra.mxu0 %v95
    %127 = vmatprep.subr.bf16.mxu0 0
    %128 = vmatpush2.bf16.msra.mxu0 0
    %129 = vmatprep.subr.bf16.mxu0 0
    %130 = vmatpush2.bf16.msra.mxu0 0
    %131 = vmatprep.subr.bf16.mxu0 0
    %132 = vmatpush2.bf16.msra.mxu0 0
    %133 = vmatprep.subr.bf16.mxu0 0
    %134 = vmatpush2.bf16.msra.mxu0 0
    %135 = vmatprep.subr.bf16.mxu0 0
    %136 = vmatpush2.bf16.msra.mxu0 0
    %137 = vmatprep.subr.bf16.mxu0 0
    %138 = vmatpush2.bf16.msra.mxu0 0
    %139 = vmatprep.subr.bf16.mxu0 0
    %140 = vmatpush2.bf16.msra.mxu0 0
    %141 = vmatprep.subr.bf16.mxu0 0
    %142 = vmatpush2.bf16.msra.mxu0 0
    %143 = vmatprep.mubr.bf16.mxu0 0
    %144 = vmatmul.mubr.bf16.gmra.mxu0 %v46
    %v145 = vpop.f32.mrf.mxu0
    %v146 = vadd.f32 0.0, %v145
    %v147 = vpop.f32.mrf.mxu0
    %v148 = vpop.f32.mrf.mxu0
    %v149 = vpop.f32.mrf.mxu0
    %150 = vdwg.mxu0
    %v151 = vmax.f32 %v146, 0.0
    %v152 = vpack.c.bf16 %v151, %v151
    %v153 = vld [vmem:[#allocation4] sm:$0xf]
    %v154 = vld [vmem:[#allocation4 + $0x4] sm:$0xf]
    %v155 = vld [vmem:[#allocation4 + $0x8] sm:$0xf]
    %v156 = vld [vmem:[#allocation4 + $0xc] sm:$0xf]
    %v157 = vld [vmem:[#allocation4 + $0x10] sm:$0xf]
    %v158 = vld [vmem:[#allocation4 + $0x14] sm:$0xf]
    %v159 = vld [vmem:[#allocation4 + $0x18] sm:$0xf]
    %v160 = vld [vmem:[#allocation4 + $0x1c] sm:$0xf]
    %v161 = vld [vmem:[#allocation4 + $0x20] sm:$0xf]
    %v162 = vld [vmem:[#allocation4 + $0x24] sm:$0xf]
    %v163 = vld [vmem:[#allocation4 + $0x28] sm:$0xf]
    %v164 = vld [vmem:[#allocation4 + $0x2c] sm:$0xf]
    %v165 = vld [vmem:[#allocation4 + $0x30] sm:$0xf]
    %v166 = vld [vmem:[#allocation4 + $0x34] sm:$0xf]
    %v167 = vld [vmem:[#allocation4 + $0x38] sm:$0xf]
    %v168 = vld [vmem:[#allocation4 + $0x3c] sm:$0xf]
    %v169 = vld [vmem:[%s3] sm:$0x1]
    %v171 = vlaneseq
    %v172 = vshrl.u32 %v171, 7
    %v173 = vsub.s32 0, %v172
    %v174 = vrot.slane %v169, %v173
    %v192 = vunpack.c.l.b16 %v153
    %v193 = vunpack.c.l.b16 %v154
    %v194 = vunpack.c.l.b16 %v155
    %v195 = vunpack.c.l.b16 %v156
    %v196 = vunpack.c.l.b16 %v157
    %v197 = vunpack.c.l.b16 %v158
    %v198 = vunpack.c.l.b16 %v159
    %v199 = vunpack.c.l.b16 %v160
    %v200 = vunpack.c.l.b16 %v161
    %v201 = vunpack.c.l.b16 %v162
    %v202 = vunpack.c.l.b16 %v163
    %v203 = vunpack.c.l.b16 %v164
    %v204 = vunpack.c.l.b16 %v165
    %v205 = vunpack.c.l.b16 %v166
    %v206 = vunpack.c.l.b16 %v167
    %v207 = vunpack.c.l.b16 %v168
    %v208 = vpack.c.b16 %v193, %v192
    %v209 = vpack.c.b16 %v195, %v194
    %v210 = vpack.c.b16 %v197, %v196
    %v211 = vpack.c.b16 %v199, %v198
    %v212 = vpack.c.b16 %v201, %v200
    %v213 = vpack.c.b16 %v203, %v202
    %v214 = vpack.c.b16 %v205, %v204
    %v215 = vpack.c.b16 %v207, %v206
    %224 = vmatprep.subr.bf16.mxu0 0
    %225 = vmatpush1.bf16.msra.mxu0 %v215
    %226 = vmatprep.subr.bf16.mxu0 0
    %227 = vmatpush1.bf16.msra.mxu0 %v214
    %228 = vmatprep.subr.bf16.mxu0 0
    %229 = vmatpush1.bf16.msra.mxu0 %v213
    %230 = vmatprep.subr.bf16.mxu0 0
    %231 = vmatpush1.bf16.msra.mxu0 %v212
    %232 = vmatprep.subr.bf16.mxu0 0
    %233 = vmatpush1.bf16.msra.mxu0 %v211
    %234 = vmatprep.subr.bf16.mxu0 0
    %235 = vmatpush1.bf16.msra.mxu0 %v210
    %236 = vmatprep.subr.bf16.mxu0 0
    %237 = vmatpush1.bf16.msra.mxu0 %v209
    %238 = vmatprep.subr.bf16.mxu0 0
    %239 = vmatpush1.bf16.msra.mxu0 %v208
    %240 = vmatprep.subr.bf16.mxu0 0
    %241 = vmatpush2.bf16.msra.mxu0 0
    %242 = vmatprep.subr.bf16.mxu0 0
    %243 = vmatpush2.bf16.msra.mxu0 0
    %244 = vmatprep.subr.bf16.mxu0 0
    %245 = vmatpush2.bf16.msra.mxu0 0
    %246 = vmatprep.subr.bf16.mxu0 0
    %247 = vmatpush2.bf16.msra.mxu0 0
    %248 = vmatprep.subr.bf16.mxu0 0
    %249 = vmatpush2.bf16.msra.mxu0 0
    %250 = vmatprep.subr.bf16.mxu0 0
    %251 = vmatpush2.bf16.msra.mxu0 0
    %252 = vmatprep.subr.bf16.mxu0 0
    %253 = vmatpush2.bf16.msra.mxu0 0
    %254 = vmatprep.subr.bf16.mxu0 0
    %255 = vmatpush2.bf16.msra.mxu0 0
    %256 = vmatprep.mubr.bf16.mxu0 0
    %257 = vmatmul.mubr.bf16.gmra.mxu0 %v152
    %v258 = vpop.f32.mrf.mxu0
    %v259 = vadd.f32 %v174, %v258
    %v260 = vpop.f32.mrf.mxu0
    %v261 = vpop.f32.mrf.mxu0
    %v262 = vpop.f32.mrf.mxu0
    %263 = vdwg.mxu0
    %v264 = vpack.c.bf16 %v259, %v259
    %265 = vst [vmem:[%s4] sm:$0xf] %v264
    // Predicated region
    $region26: #{predict.1} parent=1 // pred_check
      _
    $region27: #{predict.1} parent=1 // pred_check_branch
      %267 = sbr.rel (0) target = $region29
    $region28: #{predict.1} parent=1 // pred_region
      _
    $region29: #{predict.1} parent=1 // pred_fallthru
      _
    // Predicated region
    $region30: #{predict.1} parent=1 // pred_check
      _
    $region31: #{predict.1} parent=1 // pred_check_branch
      %269 = sbr.rel (0) target = $region33
    $region32: #{predict.1} parent=1 // pred_region
      _
    $region33: #{predict.1} parent=1 // pred_fallthru
      _
    %270 = vsyncpa [#allocation3], 1
    %271 = vsyncpa [#allocation5], 1

</llo_original>
